<compile_context>
chip_gen: v7x
topology: tpu7x:2x2x1
jax: 0.10.0
libtpu: 0.0.40
codegen_flags: <defaults>
</compile_context>

<pallas_src>
import functools

import jax
import jax.numpy as jnp
from jax.experimental import pallas as pl
from jax.experimental.pallas import tpu as pltpu


def _ceil_to(x, m):
    return -(-x // m) * m


def _vmem_budget_bytes():
    """~75% of this generation's per-core VMEM (v7x ~48 MiB, v5e/v6e ~96 MiB)."""
    cap = None
    try:
        cap = getattr(pltpu.get_tpu_info(), "vmem_capacity_bytes", None)
    except Exception:
        cap = None
    if not cap:
        cap = 64 << 20                      # conservative fallback (v7x per-core)
    cap = min(int(cap), 128 << 20)
    return (cap * 3) // 4


def _pick_divisor_chunk(hw):
    """Largest lane-dense chunk that divides HW exactly (for in-kernel loops)."""
    for t in (8192, 4096, 2048, 1024, 512, 256, 128):
        if hw % t == 0:
            return t
    return hw


def _pick_hw_tile(hw, t_cap):
    """HW tile for the two-pass path.  Returns (tile, needs_mask)."""
    for t in (16384, 8192, 4096, 2048, 1024, 512, 256, 128):
        if t <= t_cap and hw % t == 0:
            return t, False                 # exact divisor, lane-dense stores
    if hw <= t_cap:
        return hw, False                    # small image: one full-extent block
    t = max(128, (min(t_cap, hw) // 128) * 128)
    return t, True                          # cdiv grid + masked remainder tile


def _mlp_softmax(pooled, w1t_ref, w2_ref, height):
    """pooled (C,1) f32 -> list of `height` per-branch softmax weights (C,1) f32."""
    w1t = w1t_ref[...].astype(jnp.float32)                               # (C, d)
    h1 = jnp.maximum(jnp.sum(w1t * pooled, axis=0, keepdims=True), 0.0)  # (1, d)
    logits = [
        jnp.sum(w2_ref[h].astype(jnp.float32) * h1, axis=1, keepdims=True)
        for h in range(height)
    ]                                                                    # (C, 1) each
    m = logits[0]
    for l in logits[1:]:
        m = jnp.maximum(m, l)
    exps = [jnp.exp(l - m) for l in logits]
    den = exps[0]
    for e in exps[1:]:
        den = den + e
    inv_den = pl.reciprocal(den)                                         # exact
    return [e * inv_den for e in exps]


# ---------------------------------------------------------------------------
# Fused single-pass kernel: one batch item fully resident in VMEM.
# ---------------------------------------------------------------------------
def _sk_fused_kernel(*refs, height, inv_hw, chunk, n_chunks):
    x_refs = refs[:height]                  # each (1, C, HW), input dtype
    w1t_ref = refs[height]                  # (C, d)
    w2_ref = refs[height + 1]               # (height, C, d)
    o_ref = refs[height + 2]                # (1, C, HW)

    # GAP of feats_sum (chunked so f32 temporaries stay bounded).
    pooled = None
    for h in range(height):
        for ci in range(n_chunks):
            sl = slice(ci * chunk, (ci + 1) * chunk)
            ps = jnp.sum(x_refs[h][0, :, sl].astype(jnp.float32),
                         axis=-1, keepdims=True)
            pooled = ps if pooled is None else pooled + ps
    pooled = pooled * inv_hw                                             # (C, 1)

    aw = _mlp_softmax(pooled, w1t_ref, w2_ref, height)                   # (C, 1) f32

    # Weighted sum straight from the resident blocks (each map read from HBM once).
    for ci in range(n_chunks):
        sl = slice(ci * chunk, (ci + 1) * chunk)
        acc = x_refs[0][0, :, sl].astype(jnp.float32) * aw[0]
        for h in range(1, height):
            acc = acc + x_refs[h][0, :, sl].astype(jnp.float32) * aw[h]
        o_ref[0, :, sl] = acc.astype(o_ref.dtype)


# ---------------------------------------------------------------------------
# Two-pass fallback, pass 1: GAP accumulation + tiny MLP + per-channel softmax.
# ---------------------------------------------------------------------------
def _sk_attn_kernel(*refs, height, inv_hw, hw, tile, needs_mask):
    x_refs = refs[:height]                  # each (1, C, T)
    w1t_ref = refs[height]                  # (C, d)
    w2_ref = refs[height + 1]               # (height, C, d)
    attn_ref = refs[height + 2]             # (1, C, height) f32 output
    acc_ref = refs[height + 3]              # (C, 1) f32 scratch

    t = pl.program_id(1)
    c = x_refs[0].shape[1]

    @pl.when(t == 0)
    def _():
        acc_ref[...] = jnp.zeros_like(acc_ref)

    if needs_mask:
        lane = jax.lax.broadcasted_iota(jnp.int32, (c, tile), 1)
        valid = lane < (hw - t * tile)

        def _load(h):
            return jnp.where(valid, x_refs[h][0], 0)
    else:
        def _load(h):
            return x_refs[h][0]

    # Partial GAP: lane-reduce each branch tile to (C, 1) in f32, add partials.
    part = jnp.sum(_load(0).astype(jnp.float32), axis=-1, keepdims=True)
    for h in range(1, height):
        part = part + jnp.sum(_load(h).astype(jnp.float32), axis=-1, keepdims=True)
    acc_ref[...] += part

    @pl.when(t == pl.num_programs(1) - 1)
    def _():
        pooled = acc_ref[...] * inv_hw                                   # (C, 1)
        aw = _mlp_softmax(pooled, w1t_ref, w2_ref, height)
        # Build the whole (C, height) attention block and store it once.
        col = jax.lax.broadcasted_iota(jnp.int32, (c, height), 1)
        attn = jnp.zeros((c, height), jnp.float32)
        for h in range(height):
            attn = jnp.where(col == h, aw[h], attn)
        attn_ref[0] = attn


# ---------------------------------------------------------------------------
# Two-pass fallback, pass 2: weighted sum over branches, f32 accumulation.
# ---------------------------------------------------------------------------
def _sk_apply_kernel(*refs, height):
    attn_ref = refs[0]                      # (1, C, height) f32
    x_refs = refs[1:1 + height]             # each (1, C, T)
    o_ref = refs[1 + height]                # (1, C, T)

    a = attn_ref[0]                         # (C, height) f32
    acc = x_refs[0][0].astype(jnp.float32) * a[:, 0:1]
    for h in range(1, height):
        acc = acc + x_refs[h][0].astype(jnp.float32) * a[:, h:h + 1]
    o_ref[0] = acc.astype(o_ref.dtype)


def sk_fusion(in_feats, w1, w2, *, force_two_pass=False, max_hw_tile=None):
    """in_feats: list of `height` arrays (B, C, H, W); w1: (d, C); w2: (height*C, d)."""
    height = len(in_feats)
    B, C, H, W = in_feats[0].shape
    HW = H * W
    d = w1.shape[0]
    dtype = in_feats[0].dtype
    itemsize = jnp.dtype(dtype).itemsize

    # Free reshapes only — no jnp.stack copy of the feature maps in HBM.
    xs = [f.reshape(B, C, HW) for f in in_feats]
    w1t = w1.T                               # (C, d)
    w2_r = w2.reshape(height, C, d)          # PyTorch channel order: index = h*C + c

    budget = _vmem_budget_bytes()
    sub = 8 * max(1, 4 // itemsize)          # sublane tile: 8 (f32) / 16 (bf16)
    c_pad = _ceil_to(C, sub)
    hw_pad = _ceil_to(HW, 128)

    # ---- Fused single-pass path: one batch item resident in VMEM -----------
    chunk = _pick_divisor_chunk(HW)
    n_chunks = HW // chunk
    blk = c_pad * hw_pad * itemsize
    fused_est = (2 * (height + 1) * blk                  # double-buffered in/out blocks
                 + 3 * c_pad * _ceil_to(chunk, 128) * 4  # f32 compute temporaries
                 + (1 << 20))
    if not force_two_pass and fused_est <= budget:
        out = pl.pallas_call(
            functools.partial(_sk_fused_kernel, height=height, inv_hw=1.0 / HW,
                              chunk=chunk, n_chunks=n_chunks),
            out_shape=jax.ShapeDtypeStruct((B, C, HW), dtype),
            grid_spec=pltpu.PrefetchScalarGridSpec(
                num_scalar_prefetch=0,
                grid=(B,),
                in_specs=(
                    [pl.BlockSpec((1, C, HW), lambda b: (b, 0, 0)) for _ in range(height)]
                    + [pl.BlockSpec((C, d), lambda b: (0, 0)),
                       pl.BlockSpec((height, C, d), lambda b: (0, 0, 0))]
                ),
                out_specs=pl.BlockSpec((1, C, HW), lambda b: (b, 0, 0)),
            ),
            compiler_params=pltpu.CompilerParams(
                dimension_semantics=("parallel",),
                vmem_limit_bytes=int(min(max(2 * fused_est, 16 << 20), budget)),
            ),
        )(*xs, w1t, w2_r)
        return out.reshape(B, C, H, W)

    # ---- Two-pass fallback: HW-tiled streaming ------------------------------
    per_lane = (height + 1) * 2 * c_pad * itemsize + 3 * c_pad * 4
    t_cap = max(128, (budget - (2 << 20)) // per_lane)
    if max_hw_tile is not None:
        t_cap = min(t_cap, max_hw_tile)
    T, needs_mask = _pick_hw_tile(HW, t_cap)
    nT = -(-HW // T)
    t_pad = _ceil_to(T, 128)
    step_est = ((height + 1) * 2 * c_pad * t_pad * itemsize
                + 3 * c_pad * t_pad * 4 + (1 << 20))
    vmem_limit = int(min(max(2 * step_est, 16 << 20), budget))

    # Pass 1: attention weights (B, C, height), f32.
    attn = pl.pallas_call(
        functools.partial(_sk_attn_kernel, height=height, inv_hw=1.0 / HW,
                          hw=HW, tile=T, needs_mask=needs_mask),
        out_shape=jax.ShapeDtypeStruct((B, C, height), jnp.float32),
        grid_spec=pltpu.PrefetchScalarGridSpec(
            num_scalar_prefetch=0,
            grid=(B, nT),
            in_specs=(
                [pl.BlockSpec((1, C, T), lambda b, t: (b, 0, t)) for _ in range(height)]
                + [pl.BlockSpec((C, d), lambda b, t: (0, 0)),
                   pl.BlockSpec((height, C, d), lambda b, t: (0, 0, 0))]
            ),
            out_specs=pl.BlockSpec((1, C, height), lambda b, t: (b, 0, 0)),
            scratch_shapes=[pltpu.VMEM((C, 1), jnp.float32)],
        ),
        compiler_params=pltpu.CompilerParams(
            dimension_semantics=("parallel", "arbitrary"),
            vmem_limit_bytes=vmem_limit,
        ),
    )(*xs, w1t, w2_r)

    # Pass 2: weighted sum, tiled over HW.
    out = pl.pallas_call(
        functools.partial(_sk_apply_kernel, height=height),
        out_shape=jax.ShapeDtypeStruct((B, C, HW), dtype),
        grid_spec=pltpu.PrefetchScalarGridSpec(
            num_scalar_prefetch=0,
            grid=(B, nT),
            in_specs=(
                [pl.BlockSpec((1, C, height), lambda b, t: (b, 0, 0))]
                + [pl.BlockSpec((1, C, T), lambda b, t: (b, 0, t)) for _ in range(height)]
            ),
            out_specs=pl.BlockSpec((1, C, T), lambda b, t: (b, 0, t)),
        ),
        compiler_params=pltpu.CompilerParams(
            dimension_semantics=("parallel", "parallel"),
            vmem_limit_bytes=vmem_limit,
        ),
    )(attn, *xs)

    return out.reshape(B, C, H, W)


def sk_fusion_ref(in_feats, w1, w2):
    """Pure-JAX reference mirroring the PyTorch module."""
    height = len(in_feats)
    B, C, H, W = in_feats[0].shape
    x = jnp.stack(in_feats, axis=1)                       # (B, height, C, H, W)
    feats_sum = jnp.sum(x, axis=1)                        # (B, C, H, W)
    pooled = jnp.mean(feats_sum, axis=(2, 3))             # (B, C)
    h1 = jax.nn.relu(pooled @ w1.T)                       # (B, d)
    logits = h1 @ w2.T                                    # (B, height*C)
    attn = jax.nn.softmax(logits.reshape(B, height, C), axis=1)
    return jnp.sum(x * attn[:, :, :, None, None], axis=1)


if __name__ == "__main__":
    key = jax.random.PRNGKey(0)
    B, dim, H, W = 2, 4, 16, 16
    height, reduction = 2, 8
    d = max(int(dim / reduction), 4)

    k1, k2, k3, k4 = jax.random.split(key, 4)
    x0 = jax.random.normal(k1, (B, dim, H, W), jnp.float32)
    x1 = jax.random.normal(k2, (B, dim, H, W), jnp.float32)
    # Synthetic Conv2d-1x1 weights (bias=False): (d, dim) and (dim*height, d).
    w1 = jax.random.normal(k3, (d, dim), jnp.float32) * 0.02
    w2 = jax.random.normal(k4, (dim * height, d), jnp.float32) * 0.02

    ref = sk_fusion_ref([x0, x1], w1, w2)

    # 1) Fused single-pass path (inputs resident in VMEM, read once from HBM).
    out_fused = jax.block_until_ready(sk_fusion([x0, x1], w1, w2))
    assert out_fused.shape == (B, dim, H, W)
    assert jnp.allclose(out_fused, ref, atol=1e-5, rtol=1e-5), "fused path mismatch"

    # 2) Two-pass streaming fallback path.
    out_two = jax.block_until_ready(sk_fusion([x0, x1], w1, w2, force_two_pass=True))
    assert jnp.allclose(out_two, ref, atol=1e-5, rtol=1e-5), "two-pass path mismatch"

    # 3) Non-divisible HW exercises the cdiv grid + masked remainder tile.
    k5, k6 = jax.random.split(k4)
    y0 = jax.random.normal(k5, (1, dim, 10, 18), jnp.float32)
    y1 = jax.random.normal(k6, (1, dim, 10, 18), jnp.float32)
    ref_y = sk_fusion_ref([y0, y1], w1, w2)
    out_y = jax.block_until_ready(
        sk_fusion([y0, y1], w1, w2, force_two_pass=True, max_hw_tile=128))
    assert jnp.allclose(out_y, ref_y, atol=1e-5, rtol=1e-5), "masked remainder mismatch"

    print("KERNEL_OK")
</pallas_src>

<mosaic_0001>
module attributes {stable_mosaic.version = 11 : i64} {
  func.func @_sk_fused_kernel(%arg0: i32, %arg1: memref<1x4x256xf32, #tpu.memory_space<vmem>>, %arg2: memref<1x4x256xf32, #tpu.memory_space<vmem>>, %arg3: memref<4x4xf32, #tpu.memory_space<vmem>>, %arg4: memref<2x4x4xf32, #tpu.memory_space<vmem>>, %arg5: memref<1x4x256xf32, #tpu.memory_space<vmem>>) attributes {dimension_semantics = [#tpu.dimension_semantics<parallel>], iteration_bounds = array<i64: 2>, scalar_prefetch = 0 : i64, scratch_operands = 0 : i64, tpu.core_type = #tpu.core_type<tc>, window_params = [{transform_indices = @transform_0, window_bounds = array<i64: 1, 4, 256>}, {transform_indices = @transform_1, window_bounds = array<i64: 1, 4, 256>}, {pipeline_mode = #tpu.pipeline_mode<synchronous>, transform_indices = @transform_2, window_bounds = array<i64: 4, 4>}, {pipeline_mode = #tpu.pipeline_mode<synchronous>, transform_indices = @transform_3, window_bounds = array<i64: 2, 4, 4>}, {transform_indices = @transform_4, window_bounds = array<i64: 1, 4, 256>}]} {
    %c0 = arith.constant 0 : index
    %c0_0 = arith.constant 0 : index
    %c0_1 = arith.constant 0 : index
    %0 = vector.load %arg1[%c0, %c0_0, %c0_1] : memref<1x4x256xf32, #tpu.memory_space<vmem>>, vector<1x4x256xf32>
    %1 = vector.shape_cast %0 : vector<1x4x256xf32> to vector<4x256xf32>
    %cst = arith.constant dense<0.000000e+00> : vector<4xf32>
    %2 = vector.multi_reduction <add>, %1, %cst [1] : vector<4x256xf32> to vector<4xf32>
    %3 = vector.shape_cast %2 : vector<4xf32> to vector<4x1xf32>
    %c0_2 = arith.constant 0 : index
    %c0_3 = arith.constant 0 : index
    %c0_4 = arith.constant 0 : index
    %4 = vector.load %arg2[%c0_2, %c0_3, %c0_4] : memref<1x4x256xf32, #tpu.memory_space<vmem>>, vector<1x4x256xf32>
    %5 = vector.shape_cast %4 : vector<1x4x256xf32> to vector<4x256xf32>
    %cst_5 = arith.constant dense<0.000000e+00> : vector<4xf32>
    %6 = vector.multi_reduction <add>, %5, %cst_5 [1] : vector<4x256xf32> to vector<4xf32>
    %7 = vector.shape_cast %6 : vector<4xf32> to vector<4x1xf32>
    %8 = arith.addf %3, %7 : vector<4x1xf32>
    %cst_6 = arith.constant 3.906250e-03 : f32
    %9 = vector.broadcast %cst_6 : f32 to vector<4x1xf32>
    %10 = arith.mulf %8, %9 : vector<4x1xf32>
    %c0_7 = arith.constant 0 : index
    %c0_8 = arith.constant 0 : index
    %11 = vector.load %arg3[%c0_7, %c0_8] : memref<4x4xf32, #tpu.memory_space<vmem>>, vector<4x4xf32>
    %12 = vector.broadcast %10 : vector<4x1xf32> to vector<4x4xf32>
    %13 = arith.mulf %11, %12 : vector<4x4xf32>
    %cst_9 = arith.constant dense<0.000000e+00> : vector<4xf32>
    %14 = vector.multi_reduction <add>, %13, %cst_9 [0] : vector<4x4xf32> to vector<4xf32>
    %15 = vector.shape_cast %14 : vector<4xf32> to vector<1x4xf32>
    %cst_10 = arith.constant 0.000000e+00 : f32
    %16 = vector.broadcast %cst_10 : f32 to vector<1x4xf32>
    %17 = arith.maximumf %15, %16 : vector<1x4xf32>
    %c0_11 = arith.constant 0 : index
    %c0_12 = arith.constant 0 : index
    %c0_13 = arith.constant 0 : index
    %18 = vector.load %arg4[%c0_11, %c0_12, %c0_13] : memref<2x4x4xf32, #tpu.memory_space<vmem>>, vector<1x4x4xf32>
    %19 = vector.shape_cast %18 : vector<1x4x4xf32> to vector<4x4xf32>
    %20 = vector.broadcast %17 : vector<1x4xf32> to vector<4x4xf32>
    %21 = arith.mulf %19, %20 : vector<4x4xf32>
    %cst_14 = arith.constant dense<0.000000e+00> : vector<4xf32>
    %22 = vector.multi_reduction <add>, %21, %cst_14 [1] : vector<4x4xf32> to vector<4xf32>
    %23 = vector.shape_cast %22 : vector<4xf32> to vector<4x1xf32>
    %c1 = arith.constant 1 : index
    %c0_15 = arith.constant 0 : index
    %c0_16 = arith.constant 0 : index
    %24 = vector.load %arg4[%c1, %c0_15, %c0_16] : memref<2x4x4xf32, #tpu.memory_space<vmem>>, vector<1x4x4xf32>
    %25 = vector.shape_cast %24 : vector<1x4x4xf32> to vector<4x4xf32>
    %26 = vector.broadcast %17 : vector<1x4xf32> to vector<4x4xf32>
    %27 = arith.mulf %25, %26 : vector<4x4xf32>
    %cst_17 = arith.constant dense<0.000000e+00> : vector<4xf32>
    %28 = vector.multi_reduction <add>, %27, %cst_17 [1] : vector<4x4xf32> to vector<4xf32>
    %29 = vector.shape_cast %28 : vector<4xf32> to vector<4x1xf32>
    %30 = arith.maximumf %23, %29 : vector<4x1xf32>
    %31 = arith.subf %23, %30 : vector<4x1xf32>
    %32 = math.exp %31 : vector<4x1xf32>
    %33 = arith.subf %29, %30 : vector<4x1xf32>
    %34 = math.exp %33 : vector<4x1xf32>
    %35 = arith.addf %32, %34 : vector<4x1xf32>
    %36 = tpu.reciprocal %35 : vector<4x1xf32> -> vector<4x1xf32>
    %37 = arith.mulf %32, %36 : vector<4x1xf32>
    %38 = arith.mulf %34, %36 : vector<4x1xf32>
    %c0_18 = arith.constant 0 : index
    %c0_19 = arith.constant 0 : index
    %c0_20 = arith.constant 0 : index
    %39 = vector.load %arg1[%c0_18, %c0_19, %c0_20] : memref<1x4x256xf32, #tpu.memory_space<vmem>>, vector<1x4x256xf32>
    %40 = vector.shape_cast %39 : vector<1x4x256xf32> to vector<4x256xf32>
    %41 = vector.broadcast %37 : vector<4x1xf32> to vector<4x256xf32>
    %42 = arith.mulf %40, %41 : vector<4x256xf32>
    %c0_21 = arith.constant 0 : index
    %c0_22 = arith.constant 0 : index
    %c0_23 = arith.constant 0 : index
    %43 = vector.load %arg2[%c0_21, %c0_22, %c0_23] : memref<1x4x256xf32, #tpu.memory_space<vmem>>, vector<1x4x256xf32>
    %44 = vector.shape_cast %43 : vector<1x4x256xf32> to vector<4x256xf32>
    %45 = vector.broadcast %38 : vector<4x1xf32> to vector<4x256xf32>
    %46 = arith.mulf %44, %45 : vector<4x256xf32>
    %47 = arith.addf %42, %46 : vector<4x256xf32>
    %c0_24 = arith.constant 0 : index
    %c0_25 = arith.constant 0 : index
    %c0_26 = arith.constant 0 : index
    %48 = vector.load %arg5[%c0_24, %c0_25, %c0_26] : memref<1x4x256xf32, #tpu.memory_space<vmem>>, vector<1x4x256xf32>
    %49 = vector.shape_cast %48 : vector<1x4x256xf32> to vector<4x256xf32>
    %50 = vector.shape_cast %47 : vector<4x256xf32> to vector<1x4x256xf32>
    tpu.vector_store %arg5[%c0_24, %c0_25, %c0_26], %50 {strides = array<i32>} : memref<1x4x256xf32, #tpu.memory_space<vmem>>, vector<1x4x256xf32>,
    return
  }
  func.func @transform_0(%arg0: i32) -> (i32, i32, i32) {
    %c0_i32 = arith.constant 0 : i32
    %c0_i32_0 = arith.constant 0 : i32
    %c0_i32_1 = arith.constant 0 : i32
    return %arg0, %c0_i32, %c0_i32_0 : i32, i32, i32
  }
  func.func @transform_1(%arg0: i32) -> (i32, i32, i32) {
    %c0_i32 = arith.constant 0 : i32
    %c0_i32_0 = arith.constant 0 : i32
    %c0_i32_1 = arith.constant 0 : i32
    return %arg0, %c0_i32, %c0_i32_0 : i32, i32, i32
  }
  func.func @transform_2(%arg0: i32) -> (i32, i32) {
    %c0_i32 = arith.constant 0 : i32
    %c0_i32_0 = arith.constant 0 : i32
    %c0_i32_1 = arith.constant 0 : i32
    return %c0_i32, %c0_i32_0 : i32, i32
  }
  func.func @transform_3(%arg0: i32) -> (i32, i32, i32) {
    %c0_i32 = arith.constant 0 : i32
    %c0_i32_0 = arith.constant 0 : i32
    %c0_i32_1 = arith.constant 0 : i32
    %c0_i32_2 = arith.constant 0 : i32
    return %c0_i32, %c0_i32_0, %c0_i32_1 : i32, i32, i32
  }
  func.func @transform_4(%arg0: i32) -> (i32, i32, i32) {
    %c0_i32 = arith.constant 0 : i32
    %c0_i32_0 = arith.constant 0 : i32
    %c0_i32_1 = arith.constant 0 : i32
    return %arg0, %c0_i32, %c0_i32_0 : i32, i32, i32
  }
}

</mosaic_0001>

<llo_original>
// kernel: tpu_custom_call.1
$region0: #{tpu_custom_call.1}
  #allocation0 [shape = 'u32[]', space=smem, size = 0x4, offset = 0x4, fixed_abs, tag = 'smem constant byte address 0x4 - core index']
  #allocation1 [shape = 'u32[144,128]{1,0:T(1,128)}', space=vmem, size = 0x12000, scoped, tag = 'internal scratch']
  %s0 = inlined_call_operand.hbm [shape: f32[2,4,256], index: 0, kind: input, shape index: {}]
  %s1 = inlined_call_operand.hbm [shape: f32[2,4,256], index: 1, kind: input, shape index: {}]
  %s2 = inlined_call_operand.hbm [shape: f32[4,4], index: 2, kind: input, shape index: {}]
  %s3 = inlined_call_operand.vmem [shape: f32[2,4,4], index: 3, kind: input, shape index: {}]
  %s4 = inlined_call_operand.hbm [shape: f32[2,4,256], index: 4, kind: output, shape index: {}]
  %s5 = sld [smem:[#allocation0]]
  $region61: #{tpu_custom_call.1} parent=0
    _
  %s7 = ssub.s32 1, %s5
  %s8 = scalar_select 0, %s7, %s5
  $region1: #{tpu_custom_call.1} parent=0
    #allocation2 [shape = 'u8[8192]{0}', space=vmem, size = 0x2000, scoped, tag = 'input window, operand 0']
    #allocation3 [shape = 's32[2]{0}', space=sflag, size = 0x8, scoped, tag = 'scoped memory for tpu_custom_call.1']
    #allocation4 [shape = 's32[2]{0}', space=sflag, size = 0x8, scoped, tag = 'scoped memory for tpu_custom_call.1']
    #allocation5 [shape = 'u8[8192]{0}', space=vmem, size = 0x2000, scoped, tag = 'input window, operand 1']
    #allocation6 [shape = 's32[2]{0}', space=sflag, size = 0x8, scoped, tag = 'scoped memory for tpu_custom_call.1']
    #allocation7 [shape = 'u8[2048]{0}', space=vmem, size = 0x800, scoped, tag = 'input window, operand 2, single buffered']
    #allocation8 [shape = 'u8[8192]{0}', space=vmem, size = 0x2000, scoped, tag = 'output window, operand 0']
    %9 = vsyncpa [#allocation3], 0
    %s10 = scalar_lea.sflag [#allocation3], 1
    %11 = vsyncpa %s10, 0
    %12 = vsyncpa [#allocation6], 0
    %s13 = scalar_lea.sflag [#allocation6], 1
    %14 = vsyncpa %s13, 0
    %15 = vsyncpa [#allocation4], 0
    %s16 = scalar_lea.sflag [#allocation4], 1
    %17 = vsyncpa %s16, 0
    loop: start=0, step=1, limit=4
    $region2: #{tpu_custom_call.1} parent=1 // loop_pre_header
      _
    $region3: #{tpu_custom_call.1} parent=1 // loop_header
      %s19 = sphi 0, %s23
      %p20 = scmp.ge.s32.totalorder %s19, 4
      %s29 = sphi 0, %s31
      %s32 = sphi 0, %s29
      %s33 = sphi 0, %s32
      %s49 = sphi 0, %s33
      %s55 = sphi 0, %s57
      %s58 = sphi 0, %s55
      %s59 = sphi 0, %s58
      %s75 = sphi 0, %s59
      %s79 = sphi 0, %s79
      %s81 = sphi 0, %s79
      %s82 = sphi 0, %s81
      %s96 = sphi 0, %s82
      %s100 = sphi 0, %s100
      %s102 = sphi 0, %s100
      %s103 = sphi 0, %s102
      %s117 = sphi 0, %s103
      %s123 = sphi 0, %s125
      %s126 = sphi 0, %s123
      %s127 = sphi 0, %s126
      %s143 = sphi 0, %s127
    $region4: #{tpu_custom_call.1} parent=1 // loop_header_branch
      %22 = sbr.rel (%p20) target = $region8
    $region5: #{tpu_custom_call.1} parent=1 // loop_body
      %s24 = ssub.s32 %s19, 1
      %s25 = ssub.s32 %s19, 2
      %s26 = sadd.s32 %s19, 1
      %s27 = ssub.s32 %s19, %s26
      %p28 = scmp.eq.s32.totalorder %s27, 0
      %s30 = sadd.s32 %s29, 1
      %s31 = scalar_select %p28, %s29, %s30
      %p34 = pneg %p28
      %p35 = scmp.eq.s32.totalorder %s19, 1
      %p36 = por %p34, %p35
      %p37 = scmp.ne.s32.totalorder %s29, %s32
      %p38 = scmp.eq.s32.totalorder %s19, 0
      %p39 = por %p37, %p38
      %p40 = scmp.ne.s32.totalorder %s29, %s32
      %p41 = scmp.eq.s32.totalorder %s24, 1
      %p42 = por %p40, %p41
      %p43 = scmp.ne.s32.totalorder %s32, %s33
      %p44 = scmp.eq.s32.totalorder %s24, 0
      %p45 = por %p43, %p44
      %p46 = scmp.ne.s32.totalorder %s32, %s33
      %p47 = scmp.eq.s32.totalorder %s25, 1
      %p48 = por %p46, %p47
      %p50 = scmp.ne.s32.totalorder %s33, %s49
      %p51 = scmp.eq.s32.totalorder %s25, 0
      %p52 = por %p50, %p51
      %s53 = ssub.s32 %s19, %s26
      %p54 = scmp.eq.s32.totalorder %s53, 0
      %s56 = sadd.s32 %s55, 1
      %s57 = scalar_select %p54, %s55, %s56
      %p60 = pneg %p54
      %p61 = scmp.eq.s32.totalorder %s19, 1
      %p62 = por %p60, %p61
      %p63 = scmp.ne.s32.totalorder %s55, %s58
      %p64 = scmp.eq.s32.totalorder %s19, 0
      %p65 = por %p63, %p64
      %p66 = scmp.ne.s32.totalorder %s55, %s58
      %p67 = scmp.eq.s32.totalorder %s24, 1
      %p68 = por %p66, %p67
      %p69 = scmp.ne.s32.totalorder %s58, %s59
      %p70 = scmp.eq.s32.totalorder %s24, 0
      %p71 = por %p69, %p70
      %p72 = scmp.ne.s32.totalorder %s58, %s59
      %p73 = scmp.eq.s32.totalorder %s25, 1
      %p74 = por %p72, %p73
      %p76 = scmp.ne.s32.totalorder %s59, %s75
      %p77 = scmp.eq.s32.totalorder %s25, 0
      %p78 = por %p76, %p77
      %s80 = sadd.s32 %s79, 1
      %p83 = scmp.eq.s32.totalorder %s19, 1
      %p84 = scmp.ne.s32.totalorder %s79, %s81
      %p85 = scmp.eq.s32.totalorder %s19, 0
      %p86 = por %p84, %p85
      %p87 = scmp.ne.s32.totalorder %s79, %s81
      %p88 = scmp.eq.s32.totalorder %s24, 1
      %p89 = por %p87, %p88
      %p90 = scmp.ne.s32.totalorder %s81, %s82
      %p91 = scmp.eq.s32.totalorder %s24, 0
      %p92 = por %p90, %p91
      %p93 = scmp.ne.s32.totalorder %s81, %s82
      %p94 = scmp.eq.s32.totalorder %s25, 1
      %p95 = por %p93, %p94
      %p97 = scmp.ne.s32.totalorder %s82, %s96
      %p98 = scmp.eq.s32.totalorder %s25, 0
      %p99 = por %p97, %p98
      %s101 = sadd.s32 %s100, 1
      %p104 = scmp.eq.s32.totalorder %s19, 1
      %p105 = scmp.ne.s32.totalorder %s100, %s102
      %p106 = scmp.eq.s32.totalorder %s19, 0
      %p107 = por %p105, %p106
      %p108 = scmp.ne.s32.totalorder %s100, %s102
      %p109 = scmp.eq.s32.totalorder %s24, 1
      %p110 = por %p108, %p109
      %p111 = scmp.ne.s32.totalorder %s102, %s103
      %p112 = scmp.eq.s32.totalorder %s24, 0
      %p113 = por %p111, %p112
      %p114 = scmp.ne.s32.totalorder %s102, %s103
      %p115 = scmp.eq.s32.totalorder %s25, 1
      %p116 = por %p114, %p115
      %p118 = scmp.ne.s32.totalorder %s103, %s117
      %p119 = scmp.eq.s32.totalorder %s25, 0
      %p120 = por %p118, %p119
      %s121 = ssub.s32 %s19, %s26
      %p122 = scmp.eq.s32.totalorder %s121, 0
      %s124 = sadd.s32 %s123, 1
      %s125 = scalar_select %p122, %s123, %s124
      %p128 = pneg %p122
      %p129 = scmp.eq.s32.totalorder %s19, 1
      %p130 = por %p128, %p129
      %p131 = scmp.ne.s32.totalorder %s123, %s126
      %p132 = scmp.eq.s32.totalorder %s19, 0
      %p133 = por %p131, %p132
      %p134 = scmp.ne.s32.totalorder %s123, %s126
      %p135 = scmp.eq.s32.totalorder %s24, 1
      %p136 = por %p134, %p135
      %p137 = scmp.ne.s32.totalorder %s126, %s127
      %p138 = scmp.eq.s32.totalorder %s24, 0
      %p139 = por %p137, %p138
      %p140 = scmp.ne.s32.totalorder %s126, %s127
      %p141 = scmp.eq.s32.totalorder %s25, 1
      %p142 = por %p140, %p141
      %p144 = scmp.ne.s32.totalorder %s127, %s143
      %p145 = scmp.eq.s32.totalorder %s25, 0
      %p146 = por %p144, %p145
      %p147 = scmp.le.s32.totalorder 1, %s19
      %p148 = scmp.lt.s32.totalorder %s19, 3
      %p149 = pnand %p147, %p148
      %p150 = pneg %p149
      // Predicated region
      $region9: #{tpu_custom_call.1} parent=5 // pred_check
        _
      $region10: #{tpu_custom_call.1} parent=5 // pred_check_branch
        %152 = sbr.rel (%p149) target = $region12
      $region11: #{tpu_custom_call.1} parent=5 // pred_region
        %s153 = ssub.s32 %s19, 1
        // Predicated region
        $region13: #{tpu_custom_call.1} parent=11 // pred_check
          %p154 = pneg %p92
        $region14: #{tpu_custom_call.1} parent=11 // pred_check_branch
          %156 = sbr.rel (%p154) target = $region16
        $region15: #{tpu_custom_call.1} parent=11 // pred_region
          %s158 = ssub.s32 64, 64
          %159 = vsyncadd [#allocation6], %s158
          %s161 = sshll.u32 [#allocation7], 4
          %s162 = int_to_ptr.vmem [resolvable:$true] %s161
          %164 = dma.hbm_to_vmem [thread:$0]  %s2, 64, %s162, [#allocation6]
        $region16: #{tpu_custom_call.1} parent=11 // pred_fallthru
          _
        // Predicated region
        $region17: #{tpu_custom_call.1} parent=11 // pred_check
          %p165 = pneg %p113
        $region18: #{tpu_custom_call.1} parent=11 // pred_check_branch
          %167 = sbr.rel (%p165) target = $region20
        $region19: #{tpu_custom_call.1} parent=11 // pred_region
          _
        $region20: #{tpu_custom_call.1} parent=11 // pred_fallthru
          _
      $region12: #{tpu_custom_call.1} parent=5 // pred_fallthru
        _
      %p168 = scmp.lt.s32.totalorder %s19, 2
      // Predicated region
      $region21: #{tpu_custom_call.1} parent=5 // pred_check
        %p169 = pneg %p168
      $region22: #{tpu_custom_call.1} parent=5 // pred_check_branch
        %171 = sbr.rel (%p169) target = $region24
      $region23: #{tpu_custom_call.1} parent=5 // pred_region
        // Predicated region
        $region25: #{tpu_custom_call.1} parent=23 // pred_check
          %p172 = pneg %p39
        $region26: #{tpu_custom_call.1} parent=23 // pred_check_branch
          %174 = sbr.rel (%p172) target = $region28
        $region27: #{tpu_custom_call.1} parent=23 // pred_region
          %s175 = sand.u32 %s29, 1
          %s176 = scalar_lea.sflag [#allocation3], %s175
          %s177 = sand.u32 %s29, 1
          %s178 = smul.addr %s177, 8
          %s179 = scalar_lea.vmem [#allocation2], %s178
          %s181 = ssub.s32 128, 128
          %182 = vsyncadd %s176, %s181
          %s183 = smul.addr %s19, 2
          %s184 = smul.addr %s183, 64
          %s185 = scalar_lea.hbm %s0, %s184
          %s187 = sshll.u32 %s179, 4
          %s188 = int_to_ptr.vmem [resolvable:$true] %s187
          %190 = dma.hbm_to_vmem [thread:$0]  %s185, 128, %s188, %s176
        $region28: #{tpu_custom_call.1} parent=23 // pred_fallthru
          _
        // Predicated region
        $region29: #{tpu_custom_call.1} parent=23 // pred_check
          %p191 = pneg %p65
        $region30: #{tpu_custom_call.1} parent=23 // pred_check_branch
          %193 = sbr.rel (%p191) target = $region32
        $region31: #{tpu_custom_call.1} parent=23 // pred_region
          %s194 = sand.u32 %s19, 1
          %s195 = scalar_lea.sflag [#allocation6], %s194
          %s196 = sand.u32 %s55, 1
          %s197 = smul.addr %s196, 8
          %s198 = scalar_lea.vmem [#allocation5], %s197
          %s200 = ssub.s32 128, 128
          %201 = vsyncadd %s195, %s200
          %s202 = smul.addr %s19, 2
          %s203 = smul.addr %s202, 64
          %s204 = scalar_lea.hbm %s1, %s203
          %s206 = sshll.u32 %s198, 4
          %s207 = int_to_ptr.vmem [resolvable:$true] %s206
          %209 = dma.hbm_to_vmem [thread:$0]  %s204, 128, %s207, %s195
        $region32: #{tpu_custom_call.1} parent=23 // pred_fallthru
          _
      $region24: #{tpu_custom_call.1} parent=5 // pred_fallthru
        _
      %p210 = scmp.le.s32.totalorder 1, %s19
      %p211 = scmp.lt.s32.totalorder %s19, 3
      %p212 = pnand %p210, %p211
      %p213 = pneg %p212
      // Predicated region
      $region33: #{tpu_custom_call.1} parent=5 // pred_check
        _
      $region34: #{tpu_custom_call.1} parent=5 // pred_check_branch
        %215 = sbr.rel (%p212) target = $region36
      $region35: #{tpu_custom_call.1} parent=5 // pred_region
        %s216 = ssub.s32 %s19, 1
        %s217 = sand.u32 %s32, 1
        %s218 = scalar_lea.sflag [#allocation3], %s217
        %s219 = sand.u32 %s32, 1
        %s220 = smul.addr %s219, 8
        %s221 = scalar_lea.vmem [#allocation2], %s220
        // Predicated region
        $region37: #{tpu_custom_call.1} parent=35 // pred_check
          %p222 = pneg %p45
        $region38: #{tpu_custom_call.1} parent=35 // pred_check_branch
          %224 = sbr.rel (%p222) target = $region40
        $region39: #{tpu_custom_call.1} parent=35 // pred_region
          %225 = dma.done %s218, 128
        $region40: #{tpu_custom_call.1} parent=35 // pred_fallthru
          _
        %s226 = sand.u32 %s24, 1
        %s227 = scalar_lea.sflag [#allocation6], %s226
        %s228 = sand.u32 %s58, 1
        %s229 = smul.addr %s228, 8
        %s230 = scalar_lea.vmem [#allocation5], %s229
        // Predicated region
        $region41: #{tpu_custom_call.1} parent=35 // pred_check
          %p231 = pneg %p71
        $region42: #{tpu_custom_call.1} parent=35 // pred_check_branch
          %233 = sbr.rel (%p231) target = $region44
        $region43: #{tpu_custom_call.1} parent=35 // pred_region
          %234 = dma.done %s227, 128
        $region44: #{tpu_custom_call.1} parent=35 // pred_fallthru
          _
        // Predicated region
        $region45: #{tpu_custom_call.1} parent=35 // pred_check
          %p235 = pneg %p92
        $region46: #{tpu_custom_call.1} parent=35 // pred_check_branch
          %237 = sbr.rel (%p235) target = $region48
        $region47: #{tpu_custom_call.1} parent=35 // pred_region
          %238 = dma.done [#allocation6], 64
        $region48: #{tpu_custom_call.1} parent=35 // pred_fallthru
          _
        %s239 = sand.u32 %s32, 1
        %s240 = scalar_lea.sflag [#allocation3], %s239
        %s241 = sand.u32 %s32, 1
        %s242 = smul.addr %s241, 8
        %s243 = scalar_lea.vmem [#allocation2], %s242
        %p244 = pneg %p45
        %p245 = pneg %p42
        %s246 = sand.u32 %s24, 1
        %s247 = scalar_lea.sflag [#allocation6], %s246
        %s248 = sand.u32 %s58, 1
        %s249 = smul.addr %s248, 8
        %s250 = scalar_lea.vmem [#allocation5], %s249
        %p251 = pneg %p71
        %p252 = pneg %p68
        %p253 = pneg %p92
        %p254 = pneg %p89
        %p255 = pneg %p113
        %p256 = pneg %p110
        %p257 = pneg %p139
        %p258 = pneg %p136
        %s259 = sand.u32 %s126, 1
        %s260 = scalar_lea.sflag [#allocation4], %s259
        %s261 = sand.u32 %s126, 1
        %s262 = smul.addr %s261, 8
        %s263 = scalar_lea.vmem [#allocation8], %s262
        %v264 = vld [vmem:[%s221] sm:$0xff]
        %v266 = vcombine.high %v264, %v264
        %vm268 = vcmask 1043456
        %v269 = vsel %vm268, %v264, 0.0
        %v270 = vsel %vm268, %v266, 0.0
        %v271 = vadd.f32 %v269, %v270
        %272 = vadd.xlane.f32.xlu0 %v271
        %v273 = vpop.xlane.xlu0 %272
        %v274 = vld [vmem:[%s230] sm:$0xff]
        %v276 = vcombine.high %v274, %v274
        %v278 = vsel %vm268, %v274, 0.0
        %v279 = vsel %vm268, %v276, 0.0
        %v280 = vadd.f32 %v278, %v279
        %281 = vadd.xlane.f32.xlu0 %v280
        %v282 = vpop.xlane.xlu0 %281
        %v283 = vadd.f32 %v273, %v282
        %v284 = vmul.f32 %v283, 0.00390625
        %v285 = vld [vmem:[#allocation7] sm:$0xf]
        %v286 = vmul.f32 %v285, %v284
        %vm287 = vcmask 27648
        %v288 = vsel %vm287, %v286, 0.0
        %v289 = vrot.slane %v288, 4
        %v290 = vadd.f32 %v288, %v289
        %v291 = vrot.slane %v290, 2
        %v292 = vadd.f32 %v290, %v291
        %v293 = vrot.slane %v292, 1
        %v294 = vadd.f32 %v292, %v293
        %v295 = vmax.f32 %v294, 0.0
        %v296 = vld [vmem:[%s3] sm:$0xf]
        %v297 = vmul.f32 %v296, %v295
        %v298 = vsel %vm287, %v297, 0.0
        %299 = vadd.xlane.f32.xlu0 %v298
        %v300 = vpop.xlane.xlu0 %299
        %s301 = scalar_lea.vmem %s3, 4
        %v302 = vld [vmem:[%s301] sm:$0xf]
        %v303 = vmul.f32 %v302, %v295
        %v304 = vsel %vm287, %v303, 0.0
        %305 = vadd.xlane.f32.xlu0 %v304
        %v306 = vpop.xlane.xlu0 %305
        %v307 = vmax.f32 %v300, %v306
        %v308 = vsub.f32 %v300, %v307
        %v309 = vmul.f32 %v308, 1.442695
        %v310 = vpow.pop %v309
        %v311 = vsub.f32 %v306, %v307
        %v312 = vmul.f32 %v311, 1.442695
        %v313 = vpow.pop %v312
        %v314 = vadd.f32 %v310, %v313
        %v315 = vrcp.pop %v314
        %v316 = vmul.f32 %v310, %v315
        %v317 = vmul.f32 %v313, %v315
        %v320 = vunpack.c.l.s4 839922192
        %v321 = vunpack.c.0.s8 %v320
        %v322 = vlaneseq
        %v323 = vshrl.u32 %v322, 7
        %v324 = vsub.s32 %v321, %v323
        %v325 = vrot.slane %v316, %v324
        %v327 = vmul.f32 %v264, %v325
        %v330 = vunpack.c.l.s4 839922192
        %v331 = vunpack.c.0.s8 %v330
        %v332 = vlaneseq
        %v333 = vshrl.u32 %v332, 7
        %v334 = vsub.s32 %v331, %v333
        %v335 = vrot.slane %v317, %v334
        %v337 = vmul.f32 %v274, %v335
        %v338 = vadd.f32 %v327, %v337
        %339 = vst [vmem:[%s263] sm:$0xff] %v338
        %s340 = sand.u32 %s126, 1
        %s341 = scalar_lea.sflag [#allocation4], %s340
        %s342 = sand.u32 %s126, 1
        %s343 = smul.addr %s342, 8
        %s344 = scalar_lea.vmem [#allocation8], %s343
        // Predicated region
        $region49: #{tpu_custom_call.1} parent=35 // pred_check
          %p345 = pneg %p136
        $region50: #{tpu_custom_call.1} parent=35 // pred_check_branch
          %347 = sbr.rel (%p345) target = $region52
        $region51: #{tpu_custom_call.1} parent=35 // pred_region
          %s349 = ssub.s32 128, 128
          %350 = vsyncadd %s341, %s349
          %s351 = smul.addr %s24, 2
          %s352 = smul.addr %s351, 64
          %s353 = scalar_lea.hbm %s4, %s352
          %s355 = sshll.u32 %s344, 4
          %s356 = int_to_ptr.vmem [resolvable:$true] %s355
          %358 = dma.vmem_to_hbm [thread:$0]  %s356, 128, %s353, %s341
        $region52: #{tpu_custom_call.1} parent=35 // pred_fallthru
          _
      $region36: #{tpu_custom_call.1} parent=5 // pred_fallthru
        _
      %p359 = scmp.le.s32.totalorder 2, %s19
      // Predicated region
      $region53: #{tpu_custom_call.1} parent=5 // pred_check
        %p360 = pneg %p359
      $region54: #{tpu_custom_call.1} parent=5 // pred_check_branch
        %362 = sbr.rel (%p360) target = $region56
      $region55: #{tpu_custom_call.1} parent=5 // pred_region
        %s363 = ssub.s32 %s19, 2
        // Predicated region
        $region57: #{tpu_custom_call.1} parent=55 // pred_check
          %p364 = pneg %p142
        $region58: #{tpu_custom_call.1} parent=55 // pred_check_branch
          %366 = sbr.rel (%p364) target = $region60
        $region59: #{tpu_custom_call.1} parent=55 // pred_region
          %s367 = sand.u32 %s127, 1
          %s368 = scalar_lea.sflag [#allocation4], %s367
          %s369 = sand.u32 %s127, 1
          %s370 = smul.addr %s369, 8
          %s371 = scalar_lea.vmem [#allocation8], %s370
          %372 = dma.done %s368, 128
        $region60: #{tpu_custom_call.1} parent=55 // pred_fallthru
          _
      $region56: #{tpu_custom_call.1} parent=5 // pred_fallthru
        _
    $region6: #{tpu_custom_call.1} parent=1 // loop_footer
      %s23 = sadd.s32 1, %s19
    $region7: #{tpu_custom_call.1} parent=1 // loop_footer_branch
      %18 = sbr.rel target = $region3
    $region8: #{tpu_custom_call.1} parent=1 // loop_exit
      _
    %373 = vsyncpa [#allocation3], 1
    %s374 = scalar_lea.sflag [#allocation3], 1
    %375 = vsyncpa %s374, 1
    %376 = vsyncpa [#allocation6], 1
    %s377 = scalar_lea.sflag [#allocation6], 1
    %378 = vsyncpa %s377, 1
    %379 = vsyncpa [#allocation4], 1
    %s380 = scalar_lea.sflag [#allocation4], 1
    %381 = vsyncpa %s380, 1

</llo_original>
